<compile_context>
chip_gen: v5e
topology: v5e:2x2
jax: 0.10.0
libtpu: 0.0.40
codegen_flags: <defaults>
</compile_context>

<pallas_src>
import numpy as np
import jax
import jax.numpy as jnp
from jax.experimental import pallas as pl
from jax.experimental.pallas import tpu as pltpu

# ---------------- module configuration (matches PyTorch defaults) -----------
NPIX = 16
NPIX2 = NPIX * NPIX
N_PIECES = 4
FOV = 160.0
R_RANGE = (10.0, 40.0)
WIDTH_RANGE = (1.0, 40.0)
DELTA_H = 2.0 * np.pi / N_PIECES
X0 = -np.pi
FLUX_FLAG = False  # TODO(synk): flux_flag=True branch (extra flux scale) not wired up.

NSPLINE = 4 * N_PIECES + 1          # a|b|c|d coeffs + ones column  -> 17
NCOEF = NSPLINE + 2                 # + r + (-0.5/sigma^2)          -> 19
DEFAULT_BLOCK_B = 2048              # v7x-safe ceiling (64 MiB VMEM per TC)
VMEM_LIMIT_BYTES = 48 * 1024 * 1024


def _round_up(x, m):
    return ((x + m - 1) // m) * m


def _build_spline_ainv():
    n, dh = N_PIECES, DELTA_H
    A = np.zeros((3 * n, 3 * n), dtype=np.float64)
    for k in range(n):
        A[k, 3 * k] = dh
        A[k, 3 * k + 1] = dh ** 2
        A[k, 3 * k + 2] = dh ** 3
        A[k + n, 3 * k] = 1.0
        A[k + n, 3 * k + 1] = 2.0 * dh
        A[k + n, 3 * k + 2] = 3.0 * dh ** 2
        A[k + n, (3 * k + 3) % (3 * n)] = -1.0
        A[k + 2 * n, 3 * k + 1] = 2.0
        A[k + 2 * n, 3 * k + 2] = 6.0 * dh
        A[k + 2 * n, (3 * k + 4) % (3 * n)] = -2.0
    return np.linalg.inv(A).astype(np.float32)


def _build_grids():
    gap = 1.0 / NPIX
    xs = ((-1.0 + gap) + 2.0 * gap * np.arange(NPIX)).astype(np.float32)
    grid_x = np.broadcast_to(xs[None, :], (NPIX, NPIX)).astype(np.float32)
    grid_y = np.broadcast_to(-xs[:, None], (NPIX, NPIX)).astype(np.float32)
    grid_r = np.sqrt(grid_x ** 2 + grid_y ** 2).astype(np.float32)
    grid_theta = np.arctan2(grid_y, grid_x).astype(np.float32)
    return grid_r, grid_theta


def _build_spline_basis(grid_theta):
    """[NSPLINE, NPIX2]: rows = (mask_k | xdc_k | xdc_k^2 | xdc_k^3 | ones)."""
    theta = grid_theta.reshape(1, -1).astype(np.float32)          # [1, 256]
    x_left = (X0 + DELTA_H * np.arange(N_PIECES)).astype(np.float32)[:, None]
    xd = theta - x_left                                           # [n, 256]
    in_rng = (xd <= np.float32(DELTA_H)) & (xd >= np.float32(0.0))
    mask = in_rng.astype(np.float32)
    xdc = np.where(in_rng, xd, 0.0).astype(np.float32)
    ones = np.ones((1, NPIX2), dtype=np.float32)                  # folds the "+1"
    return np.concatenate([mask, xdc, xdc ** 2, xdc ** 3, ones],
                          axis=0).astype(np.float32)


AINV = _build_spline_ainv()
GRID_R, GRID_THETA = _build_grids()
GRID_R_FLAT = GRID_R.reshape(1, NPIX2).astype(np.float32)          # [1, 256]
SPLINE_BASIS_P1 = _build_spline_basis(GRID_THETA)                  # [17, 256]
X_LEFT = (X0 + DELTA_H * np.arange(N_PIECES)).astype(np.float32)
DELTA_H_F32 = np.float32(DELTA_H)


# ------------------------------- Pallas kernel ------------------------------
def ring_kernel(coef_ref, sbasis_ref, gridr_ref, out_ref):
    # coef_ref   : [TB, 19]   packed per-row data (spline a|b|c|d, 1, r, -0.5/s^2)
    # sbasis_ref : [17, 256]  constant spline basis (mask/xdc/xdc^2/xdc^3/ones)
    # gridr_ref  : [1, 256]   constant radial grid (lane-dense)
    # out_ref    : [TB, 256]  normalized crescent images
    coef = coef_ref[...]                                    # [TB, 19]

    # Spline evaluation (+1 folded in) on the otherwise-idle MXU: [TB,17]@[17,256].
    s = jnp.dot(coef[:, :NSPLINE], sbasis_ref[...],
                preferred_element_type=jnp.float32)         # [TB, 256] == 1 + spline

    # Gaussian ring on the VPU (factored form avoids cancellation for thin rings).
    r = coef[:, NSPLINE:NSPLINE + 1]                        # [TB, 1]
    neg_inv_2sig2 = coef[:, NSPLINE + 1:NSPLINE + 2]        # [TB, 1]
    diff = gridr_ref[...] - r                               # [TB, 256]
    crescent = s * jnp.exp(diff * diff * neg_inv_2sig2)

    # Per-row normalization sum as a second MXU matmul (keeps the XLU free).
    ones_col = jnp.ones((NPIX2, 1), jnp.float32)
    total = jnp.dot(crescent, ones_col,
                    preferred_element_type=jnp.float32)     # [TB, 1]
    out_ref[...] = crescent * (1.0 / total)                 # exact div: one per row


# ------------------------------- JAX wrapper --------------------------------
def _choose_tiling(B, block_cap):
    """Pick (tb, num_blocks, b_pad): tb multiple of 8, <= block_cap, low waste,
    and >= 2 blocks when the batch allows (feeds both v7x TensorCores)."""
    block_cap = max(8, (block_cap // 8) * 8)
    min_blocks = 2 if B >= 16 else 1
    num_blocks = max(-(-B // block_cap), min_blocks)
    tb = _round_up(-(-B // num_blocks), 8)
    return tb, num_blocks, tb * num_blocks


def spline_brightness_ring(params, block_b=DEFAULT_BLOCK_B):
    """params: [B, 2 + n_pieces] float32 in [0, 1]; returns [B, npix, npix]."""
    params = params.astype(jnp.float32)
    B, nfeat = params.shape

    tb, num_blocks, b_pad = _choose_tiling(B, block_b)
    if b_pad != B:
        params = jnp.concatenate(
            [params, jnp.zeros((b_pad - B, nfeat), jnp.float32)], axis=0)

    # compute_features (glue)
    r = R_RANGE[0] / (0.5 * FOV) + params[:, 0] * (R_RANGE[1] - R_RANGE[0]) / (0.5 * FOV)
    sigma = WIDTH_RANGE[0] / (0.5 * FOV) + params[:, 1] * (WIDTH_RANGE[1] - WIDTH_RANGE[0]) / (0.5 * FOV)
    y = 0.9 * (2.0 * params[:, 2:2 + N_PIECES] - 1.0)

    # PeriodicalCubicSpline.fit (tiny matmul, glue)
    ainv = jnp.asarray(AINV)
    y_next = y[:, np.arange(1, N_PIECES + 1) % N_PIECES]
    bcd = jnp.matmul(y_next - y, ainv[:, :N_PIECES].T)

    neg_inv_2sig2 = -0.5 / (sigma * sigma)
    coef = jnp.concatenate(
        [y, bcd[:, 0::3], bcd[:, 1::3], bcd[:, 2::3],      # a | b | c | d
         jnp.ones((b_pad, 1), jnp.float32),                # ones column (the "+1")
         r[:, None], neg_inv_2sig2[:, None]],              # packed per-row scalars
        axis=1)                                            # [b_pad, NCOEF]

    grid_spec = pltpu.PrefetchScalarGridSpec(
        num_scalar_prefetch=0,
        grid=(num_blocks,),
        in_specs=[
            pl.BlockSpec((tb, NCOEF), lambda i: (i, 0)),              # packed coeffs
            pl.BlockSpec((NSPLINE, NPIX2), lambda i: (0, 0)),         # basis (constant)
            pl.BlockSpec((1, NPIX2), lambda i: (0, 0)),               # grid_r (constant)
        ],
        out_specs=pl.BlockSpec((tb, NPIX2), lambda i: (i, 0)),
    )

    out_flat = pl.pallas_call(
        ring_kernel,
        out_shape=jax.ShapeDtypeStruct((b_pad, NPIX2), jnp.float32),
        grid_spec=grid_spec,
        compiler_params=pltpu.CompilerParams(
            dimension_semantics=("parallel",),
            vmem_limit_bytes=VMEM_LIMIT_BYTES),
    )(coef, jnp.asarray(SPLINE_BASIS_P1), jnp.asarray(GRID_R_FLAT))

    return out_flat[:B].reshape(B, NPIX, NPIX)


# ------------------------- pure-numpy reference -----------------------------
def reference(params_np):
    params_np = params_np.astype(np.float32)
    B = params_np.shape[0]
    r = (R_RANGE[0] / (0.5 * FOV)
         + params_np[:, 0] * (R_RANGE[1] - R_RANGE[0]) / (0.5 * FOV))[:, None, None]
    sigma = (WIDTH_RANGE[0] / (0.5 * FOV)
             + params_np[:, 1] * (WIDTH_RANGE[1] - WIDTH_RANGE[0]) / (0.5 * FOV))[:, None, None]
    y = 0.9 * (2.0 * params_np[:, 2:2 + N_PIECES] - 1.0)
    y_next = y[:, np.arange(1, N_PIECES + 1) % N_PIECES]
    bcd = (y_next - y) @ AINV[:, :N_PIECES].T
    a = y[:, :, None]
    b = bcd[:, 0::3][:, :, None]
    c = bcd[:, 1::3][:, :, None]
    d = bcd[:, 2::3][:, :, None]

    ring = np.exp(-0.5 * (GRID_R[None] - r) ** 2 / sigma ** 2)

    theta_flat = GRID_THETA.reshape(-1)
    xd = theta_flat[None, :] - X_LEFT[:, None]
    in_rng = (xd <= DELTA_H_F32) & (xd >= 0.0)
    xdc = np.where(in_rng, xd, 0.0).astype(np.float32)
    mask = in_rng.astype(np.float32)
    y_interp = (a * mask[None] + b * xdc[None]
                + c * xdc[None] ** 2 + d * xdc[None] ** 3).sum(1)
    S = 1.0 + y_interp.reshape(B, NPIX, NPIX)
    crescent = S * ring
    crescent = crescent / crescent.sum(axis=(-1, -2), keepdims=True)
    return crescent.astype(np.float32)


if __name__ == "__main__":
    key = jax.random.PRNGKey(0)
    B = 2
    params = jax.random.uniform(key, (B, 2 + N_PIECES), dtype=jnp.float32)

    out = spline_brightness_ring(params)
    out = jax.block_until_ready(out)

    ref = reference(np.asarray(params))
    assert out.shape == (B, NPIX, NPIX) and out.dtype == jnp.float32
    np.testing.assert_allclose(np.asarray(out), ref, rtol=1e-4, atol=1e-5)

    print("KERNEL_OK")
</pallas_src>

<mosaic_0001>
module attributes {stable_mosaic.version = 11 : i64} {
  func.func @ring_kernel(%arg0: i32, %arg1: memref<8x19xf32, #tpu.memory_space<vmem>>, %arg2: memref<17x256xf32, #tpu.memory_space<vmem>>, %arg3: memref<1x256xf32, #tpu.memory_space<vmem>>, %arg4: memref<8x256xf32, #tpu.memory_space<vmem>>) attributes {dimension_semantics = [#tpu.dimension_semantics<parallel>], iteration_bounds = array<i64: 1>, scalar_prefetch = 0 : i64, scratch_operands = 0 : i64, tpu.core_type = #tpu.core_type<tc>, window_params = [{transform_indices = @transform_0, window_bounds = array<i64: 8, 19>}, {pipeline_mode = #tpu.pipeline_mode<synchronous>, transform_indices = @transform_1, window_bounds = array<i64: 17, 256>}, {pipeline_mode = #tpu.pipeline_mode<synchronous>, transform_indices = @transform_2, window_bounds = array<i64: 1, 256>}, {transform_indices = @transform_3, window_bounds = array<i64: 8, 256>}]} {
    %c0 = arith.constant 0 : index
    %c0_0 = arith.constant 0 : index
    %0 = vector.load %arg1[%c0, %c0_0] : memref<8x19xf32, #tpu.memory_space<vmem>>, vector<8x19xf32>
    %1 = vector.extract_strided_slice %0 {offsets = [0, 0], sizes = [8, 17], strides = [1, 1]} : vector<8x19xf32> to vector<8x17xf32>
    %c0_1 = arith.constant 0 : index
    %c0_2 = arith.constant 0 : index
    %2 = vector.load %arg2[%c0_1, %c0_2] : memref<17x256xf32, #tpu.memory_space<vmem>>, vector<17x256xf32>
    %cst = arith.constant dense<0.000000e+00> : vector<8x256xf32>
    %3 = tpu.matmul %1, %2, %cst {dimension_numbers = #tpu.dot_dimension_numbers<[1], [0], [0], [1], [0, 0, 1, 1], [], []>} : vector<8x17xf32>, vector<17x256xf32>, vector<8x256xf32> -> vector<8x256xf32>
    %4 = vector.extract_strided_slice %0 {offsets = [0, 17], sizes = [8, 1], strides = [1, 1]} : vector<8x19xf32> to vector<8x1xf32>
    %5 = vector.extract_strided_slice %0 {offsets = [0, 18], sizes = [8, 1], strides = [1, 1]} : vector<8x19xf32> to vector<8x1xf32>
    %c0_3 = arith.constant 0 : index
    %c0_4 = arith.constant 0 : index
    %6 = vector.load %arg3[%c0_3, %c0_4] : memref<1x256xf32, #tpu.memory_space<vmem>>, vector<1x256xf32>
    %7 = vector.broadcast %6 : vector<1x256xf32> to vector<8x256xf32>
    %8 = vector.broadcast %4 : vector<8x1xf32> to vector<8x256xf32>
    %9 = arith.subf %7, %8 : vector<8x256xf32>
    %10 = arith.mulf %9, %9 : vector<8x256xf32>
    %11 = vector.broadcast %5 : vector<8x1xf32> to vector<8x256xf32>
    %12 = arith.mulf %10, %11 : vector<8x256xf32>
    %13 = math.exp %12 : vector<8x256xf32>
    %14 = arith.mulf %3, %13 : vector<8x256xf32>
    %cst_5 = arith.constant 1.000000e+00 : f32
    %15 = vector.broadcast %cst_5 : f32 to vector<256x1xf32>
    %cst_6 = arith.constant dense<0.000000e+00> : vector<8x1xf32>
    %16 = tpu.matmul %14, %15, %cst_6 {dimension_numbers = #tpu.dot_dimension_numbers<[1], [0], [0], [1], [0, 0, 1, 1], [], []>} : vector<8x256xf32>, vector<256x1xf32>, vector<8x1xf32> -> vector<8x1xf32>
    %cst_7 = arith.constant 1.000000e+00 : f32
    %17 = vector.broadcast %cst_7 : f32 to vector<8x1xf32>
    %18 = arith.divf %17, %16 : vector<8x1xf32>
    %19 = vector.broadcast %18 : vector<8x1xf32> to vector<8x256xf32>
    %20 = arith.mulf %14, %19 : vector<8x256xf32>
    %c0_8 = arith.constant 0 : index
    %c0_9 = arith.constant 0 : index
    %21 = vector.load %arg4[%c0_8, %c0_9] : memref<8x256xf32, #tpu.memory_space<vmem>>, vector<8x256xf32>
    tpu.vector_store %arg4[%c0_8, %c0_9], %20 {strides = array<i32>} : memref<8x256xf32, #tpu.memory_space<vmem>>, vector<8x256xf32>,
    return
  }
  func.func @transform_0(%arg0: i32) -> (i32, i32) {
    %c0_i32 = arith.constant 0 : i32
    %c0_i32_0 = arith.constant 0 : i32
    return %arg0, %c0_i32 : i32, i32
  }
  func.func @transform_1(%arg0: i32) -> (i32, i32) {
    %c0_i32 = arith.constant 0 : i32
    %c0_i32_0 = arith.constant 0 : i32
    %c0_i32_1 = arith.constant 0 : i32
    return %c0_i32, %c0_i32_0 : i32, i32
  }
  func.func @transform_2(%arg0: i32) -> (i32, i32) {
    %c0_i32 = arith.constant 0 : i32
    %c0_i32_0 = arith.constant 0 : i32
    %c0_i32_1 = arith.constant 0 : i32
    return %c0_i32, %c0_i32_0 : i32, i32
  }
  func.func @transform_3(%arg0: i32) -> (i32, i32) {
    %c0_i32 = arith.constant 0 : i32
    %c0_i32_0 = arith.constant 0 : i32
    return %arg0, %c0_i32 : i32, i32
  }
}

</mosaic_0001>

<llo_original>
// kernel: tpu_custom_call.1
$region0: #{tpu_custom_call.1}
  #allocation0 [shape = 'u32[]', space=smem, size = 0x4, offset = 0x4, fixed_abs, tag = 'smem constant byte address 0x4 - core index']
  #allocation1 [shape = 'u32[72,128]{1,0:T(1,128)}', space=vmem, size = 0x9000, scoped, tag = 'internal scratch']
  %s0 = inlined_call_operand.hbm [shape: f32[8,19], index: 0, kind: input, shape index: {}]
  %s1 = inlined_call_operand.hbm [shape: f32[17,256], index: 1, kind: input, shape index: {}]
  %s2 = inlined_call_operand.hbm [shape: f32[1,256], index: 2, kind: input, shape index: {}]
  %s3 = inlined_call_operand.hbm [shape: f32[8,256], index: 3, kind: output, shape index: {}]
  %s4 = sld [smem:[#allocation0]]
  $region34: #{tpu_custom_call.1} parent=0
    _
  %s6 = ssub.s32 1, %s4
  %s7 = scalar_select 0, %s6, %s4
  $region1: #{tpu_custom_call.1} parent=0
    #allocation2 [shape = 'u8[4096]{0}', space=vmem, size = 0x1000, scoped, tag = 'input window, operand 0, single buffered']
    #allocation3 [shape = 's32[1]{0}', space=sflag, size = 0x4, scoped, tag = 'scoped memory for tpu_custom_call.1']
    #allocation4 [shape = 's32[1]{0}', space=sflag, size = 0x4, scoped, tag = 'scoped memory for tpu_custom_call.1']
    #allocation5 [shape = 'u8[24576]{0}', space=vmem, size = 0x6000, scoped, tag = 'input window, operand 1, single buffered']
    #allocation6 [shape = 's32[1]{0}', space=sflag, size = 0x4, scoped, tag = 'scoped memory for tpu_custom_call.1']
    #allocation7 [shape = 'u8[1024]{0}', space=vmem, size = 0x400, scoped, tag = 'input window, operand 2, single buffered']
    #allocation8 [shape = 'u8[8192]{0}', space=vmem, size = 0x2000, scoped, tag = 'output window, operand 0, single buffered']
    %8 = vsyncpa [#allocation3], 0
    %9 = vsyncpa [#allocation6], 0
    %10 = vsyncpa [#allocation4], 0
    // Predicated region
    $region2: #{tpu_custom_call.1} parent=1 // pred_check
      _
    $region3: #{tpu_custom_call.1} parent=1 // pred_check_branch
      %12 = sbr.rel (0) target = $region5
    $region4: #{tpu_custom_call.1} parent=1 // pred_region
      %14 = vsyncadd [#allocation3], 0
      %s16 = sshll.u32 %s0, 4
      %s17 = int_to_ptr.hbm [resolvable:$true] %s16
      %s18 = sshll.u32 [#allocation2], 4
      %s19 = int_to_ptr.vmem [resolvable:$true] %s18
      %21 = dma.hbm_to_vmem [thread:$0]  %s17, 128, %s19, [#allocation3]
    $region5: #{tpu_custom_call.1} parent=1 // pred_fallthru
      _
    // Predicated region
    $region6: #{tpu_custom_call.1} parent=1 // pred_check
      _
    $region7: #{tpu_custom_call.1} parent=1 // pred_check_branch
      %23 = sbr.rel (0) target = $region9
    $region8: #{tpu_custom_call.1} parent=1 // pred_region
      %25 = vsyncadd [#allocation6], 0
      %s26 = sshll.u32 %s1, 4
      %s27 = int_to_ptr.hbm [resolvable:$true] %s26
      %s28 = sshll.u32 [#allocation5], 4
      %s29 = int_to_ptr.vmem [resolvable:$true] %s28
      %34 = dma.hbm_to_vmem [thread:$0]  %s27, 768, %s29, [#allocation6], 256, 256, 16
    $region9: #{tpu_custom_call.1} parent=1 // pred_fallthru
      _
    // Predicated region
    $region10: #{tpu_custom_call.1} parent=1 // pred_check
      _
    $region11: #{tpu_custom_call.1} parent=1 // pred_check_branch
      %36 = sbr.rel (0) target = $region13
    $region12: #{tpu_custom_call.1} parent=1 // pred_region
      %38 = vsyncadd [#allocation6], 0
      %s40 = sshll.u32 %s2, 4
      %s41 = int_to_ptr.hbm [resolvable:$true] %s40
      %s42 = sshll.u32 [#allocation7], 4
      %s43 = int_to_ptr.vmem [resolvable:$true] %s42
      %45 = dma.hbm_to_vmem [thread:$0]  %s41, 32, %s43, [#allocation6]
    $region13: #{tpu_custom_call.1} parent=1 // pred_fallthru
      _
    // Predicated region
    $region14: #{tpu_custom_call.1} parent=1 // pred_check
      _
    $region15: #{tpu_custom_call.1} parent=1 // pred_check_branch
      %47 = sbr.rel (0) target = $region17
    $region16: #{tpu_custom_call.1} parent=1 // pred_region
      %49 = dma.done [#allocation3], 128
    $region17: #{tpu_custom_call.1} parent=1 // pred_fallthru
      _
    // Predicated region
    $region18: #{tpu_custom_call.1} parent=1 // pred_check
      _
    $region19: #{tpu_custom_call.1} parent=1 // pred_check_branch
      %51 = sbr.rel (0) target = $region21
    $region20: #{tpu_custom_call.1} parent=1 // pred_region
      %53 = dma.done [#allocation6], 768
    $region21: #{tpu_custom_call.1} parent=1 // pred_fallthru
      _
    // Predicated region
    $region22: #{tpu_custom_call.1} parent=1 // pred_check
      _
    $region23: #{tpu_custom_call.1} parent=1 // pred_check_branch
      %55 = sbr.rel (0) target = $region25
    $region24: #{tpu_custom_call.1} parent=1 // pred_region
      %57 = dma.done [#allocation6], 32
    $region25: #{tpu_custom_call.1} parent=1 // pred_fallthru
      _
    %v58 = vld [vmem:[#allocation2] sm:$0xff]
    %v59 = vld [vmem:[#allocation5] sm:$0xff]
    %v60 = vld [vmem:[#allocation5 + $0x8] sm:$0xff]
    %v61 = vld [vmem:[#allocation5 + $0x10] sm:$0xff]
    %v62 = vld [vmem:[#allocation5 + $0x18] sm:$0xff]
    %v63 = vld [vmem:[#allocation5 + $0x20] sm:$0x1]
    %v64 = vld [vmem:[#allocation5 + $0x28] sm:$0x1]
    %vm65 = vcmask 138240
    %v67 = vsel %vm65, %v58, 0
    %vm69 = vcmask 1040384
    %v71 = vsel %vm69, %v63, 0
    %v74 = vsel %vm69, %v64, 0
    %76 = vmatpush.msra.mxu0 0.0
    %77 = vmatpush.msra.mxu0 0.0
    %78 = vmatpush.msra.mxu0 0.0
    %79 = vmatpush.msra.mxu0 0.0
    %80 = vmatpush.msra.mxu0 0.0
    %81 = vmatpush.msra.mxu0 0.0
    %82 = vmatpush.msra.mxu0 0.0
    %83 = vmatpush.msra.mxu0 0.0
    %84 = vmatpush.msra.mxu0 0.0
    %85 = vmatpush.msra.mxu0 0.0
    %86 = vmatpush.msra.mxu0 0.0
    %87 = vmatpush.msra.mxu0 0.0
    %88 = vmatpush.msra.mxu0 0.0
    %89 = vmatpush.msra.mxu0 %v71
    %90 = vmatpush.msra.mxu0 %v61
    %91 = vmatpush.msra.mxu0 %v59
    %92 = vmatmul.f32.gmra.mxu0 %v67
    %v93 = vpop.f32.mrf.mxu0
    %v94 = vadd.f32 0.0, %v93
    %95 = vdwg.mxu0
    %96 = vmatpush.msra.mxu0 0.0
    %97 = vmatpush.msra.mxu0 0.0
    %98 = vmatpush.msra.mxu0 0.0
    %99 = vmatpush.msra.mxu0 0.0
    %100 = vmatpush.msra.mxu0 0.0
    %101 = vmatpush.msra.mxu0 0.0
    %102 = vmatpush.msra.mxu0 0.0
    %103 = vmatpush.msra.mxu0 0.0
    %104 = vmatpush.msra.mxu0 0.0
    %105 = vmatpush.msra.mxu0 0.0
    %106 = vmatpush.msra.mxu0 0.0
    %107 = vmatpush.msra.mxu0 0.0
    %108 = vmatpush.msra.mxu0 0.0
    %109 = vmatpush.msra.mxu0 %v74
    %110 = vmatpush.msra.mxu0 %v62
    %111 = vmatpush.msra.mxu0 %v60
    %112 = vmatmul.f32.gmra.mxu0 %v67
    %v113 = vpop.f32.mrf.mxu0
    %v114 = vadd.f32 0.0, %v113
    %115 = vdwg.mxu0
    %v116 = vld [vmem:[#allocation7] sm:$0x3]
    %v118 = vperm.slane %v116, 0
    %v119 = vperm.slane %v116, 1
    %122 = vset.pattern.permute.xlu0 17
    %123 = vperm.xlu0 %122, %v58
    %v124 = vpop.permute.xlu0 %123
    %v126 = vsub.f32 %v118, %v124
    %v127 = vsub.f32 %v119, %v124
    %v128 = vmul.f32 %v126, %v126
    %v129 = vmul.f32 %v127, %v127
    %130 = vset.pattern.permute.xlu0 18
    %131 = vperm.xlu0 %130, %v58
    %v132 = vpop.permute.xlu0 %131
    %v134 = vmul.f32 %v128, %v132
    %v135 = vmul.f32 %v129, %v132
    %v136 = vmul.f32 %v134, 1.442695
    %v137 = vpow.pop %v136
    %v138 = vmul.f32 %v135, 1.442695
    %v139 = vpow.pop %v138
    %v140 = vmul.f32 %v94, %v137
    %v141 = vmul.f32 %v114, %v139
    %142 = vmatpush.msra.mxu0 1.0
    %143 = vmatpush.msra.mxu0 1.0
    %144 = vmatpush.msra.mxu0 1.0
    %145 = vmatpush.msra.mxu0 1.0
    %146 = vmatpush.msra.mxu0 1.0
    %147 = vmatpush.msra.mxu0 1.0
    %148 = vmatpush.msra.mxu0 1.0
    %149 = vmatpush.msra.mxu0 1.0
    %150 = vmatpush.msra.mxu0 1.0
    %151 = vmatpush.msra.mxu0 1.0
    %152 = vmatpush.msra.mxu0 1.0
    %153 = vmatpush.msra.mxu0 1.0
    %154 = vmatpush.msra.mxu0 1.0
    %155 = vmatpush.msra.mxu0 1.0
    %156 = vmatpush.msra.mxu0 1.0
    %157 = vmatpush.msra.mxu0 1.0
    %158 = vmatmul.f32.gmra.mxu0 %v140
    %v159 = vpop.f32.mrf.mxu0
    %v160 = vadd.f32 0.0, %v159
    %161 = vdwg.mxu0
    %162 = vmatpush.msra.mxu0 1.0
    %163 = vmatpush.msra.mxu0 1.0
    %164 = vmatpush.msra.mxu0 1.0
    %165 = vmatpush.msra.mxu0 1.0
    %166 = vmatpush.msra.mxu0 1.0
    %167 = vmatpush.msra.mxu0 1.0
    %168 = vmatpush.msra.mxu0 1.0
    %169 = vmatpush.msra.mxu0 1.0
    %170 = vmatpush.msra.mxu0 1.0
    %171 = vmatpush.msra.mxu0 1.0
    %172 = vmatpush.msra.mxu0 1.0
    %173 = vmatpush.msra.mxu0 1.0
    %174 = vmatpush.msra.mxu0 1.0
    %175 = vmatpush.msra.mxu0 1.0
    %176 = vmatpush.msra.mxu0 1.0
    %177 = vmatpush.msra.mxu0 1.0
    %178 = vmatmul.f32.gmra.mxu0 %v141
    %v179 = vpop.f32.mrf.mxu0
    %v180 = vadd.f32 %v160, %v179
    %181 = vdwg.mxu0
    %v182 = vrcp.pop %v180
    %v183 = vmul.f32 %v180, %v182
    %v184 = vsub.f32 1.0, %v183
    %v185 = vmul.f32 %v182, %v184
    %v186 = vadd.f32 %v182, %v185
    %vm187 = vweird.f32 %v180
    %vm188 = vweird.f32 %v182
    %vm189 = vmor %vm187, %vm188
    %v190 = vsel %vm189, %v182, %v186
    %v191 = vand.u32 2147483647, %v180
    %vm192 = vcmp.eq.f32.partialorder %v191, 8.507059e+37
    %v193 = vand.u32 %v180, 2147483648
    %v194 = vor.u32 1.1754944e-38, %v193
    %v195 = vsel %vm192, %v194, %v190
    %v196 = vmul.f32 1.0, %v195
    %198 = vset.pattern.permute.xlu0 0
    %199 = vperm.xlu0 %198, %v196
    %v200 = vpop.permute.xlu0 %199
    %v202 = vmul.f32 %v140, %v200
    %v203 = vmul.f32 %v141, %v200
    %204 = vst [vmem:[#allocation8] sm:$0xff] %v202
    %205 = vst [vmem:[#allocation8 + $0x8] sm:$0xff] %v203
    // Predicated region
    $region26: #{tpu_custom_call.1} parent=1 // pred_check
      _
    $region27: #{tpu_custom_call.1} parent=1 // pred_check_branch
      %207 = sbr.rel (0) target = $region29
    $region28: #{tpu_custom_call.1} parent=1 // pred_region
      %209 = vsyncadd [#allocation4], 0
      %s211 = sshll.u32 [#allocation8], 4
      %s212 = int_to_ptr.vmem [resolvable:$true] %s211
      %s213 = sshll.u32 %s3, 4
      %s214 = int_to_ptr.hbm [resolvable:$true] %s213
      %216 = dma.vmem_to_hbm [thread:$0]  %s212, 256, %s214, [#allocation4]
    $region29: #{tpu_custom_call.1} parent=1 // pred_fallthru
      _
    // Predicated region
    $region30: #{tpu_custom_call.1} parent=1 // pred_check
      _
    $region31: #{tpu_custom_call.1} parent=1 // pred_check_branch
      %218 = sbr.rel (0) target = $region33
    $region32: #{tpu_custom_call.1} parent=1 // pred_region
      %220 = dma.done [#allocation4], 256
    $region33: #{tpu_custom_call.1} parent=1 // pred_fallthru
      _
    %221 = vsyncpa [#allocation3], 1
    %222 = vsyncpa [#allocation6], 1
    %223 = vsyncpa [#allocation4], 1

</llo_original>
